<compile_context>
chip_gen: v5e
topology: v5e:2x2
jax: 0.10.0
libtpu: 0.0.40
codegen_flags: <defaults>
</compile_context>

<pallas_src>
import jax
import jax.numpy as jnp
from jax.experimental import pallas as pl
from jax.experimental.pallas import tpu as pltpu


def _ddg_readout_kernel(
    wt_ref, mut_ref, mask_ref,
    w1a_ref, w1b_ref, b1_ref,
    w2_ref, b2_ref,
    w3_ref, b3_ref,
    w4_ref, b4_ref,
    wp_ref,
    out_ref,
):
    TB, L, F = wt_ref.shape
    R = TB * L

    x_wt = wt_ref[...].reshape(R, F)    # (R, F)
    x_mut = mut_ref[...].reshape(R, F)  # (R, F)

    # Stack both concat orders along rows: rows [0:R] carry the (wt, mut)
    # order, rows [R:2R] carry the (mut, wt) order.  Since
    #   cat([a, b], -1) @ W1 == a @ W1[:F] + b @ W1[F:],
    # the stacked layer-1 activation is x_first @ W1a + x_second @ W1b.
    x_first = jnp.concatenate([x_wt, x_mut], axis=0)    # (2R, F)
    x_second = jnp.concatenate([x_mut, x_wt], axis=0)   # (2R, F)

    def dense(x, w_ref, b_ref=None):
        y = jnp.dot(x.astype(w_ref.dtype), w_ref[...],
                    preferred_element_type=jnp.float32)
        if b_ref is not None:
            y = y + b_ref[...]
        return y

    # Layer 1: Linear(2F -> F) + ReLU (two matmuls on the stacked block).
    h = (jnp.dot(x_first.astype(w1a_ref.dtype), w1a_ref[...],
                 preferred_element_type=jnp.float32)
         + jnp.dot(x_second.astype(w1b_ref.dtype), w1b_ref[...],
                   preferred_element_type=jnp.float32)
         + b1_ref[...])
    h = jnp.maximum(h, 0.0)
    # Layers 2-4: single matmul each on (2R, F).
    h = jnp.maximum(dense(h, w2_ref, b2_ref), 0.0)
    h = jnp.maximum(dense(h, w3_ref, b3_ref), 0.0)
    h = dense(h, w4_ref, b4_ref)                         # (2R, F)

    feat_diff = h[:R, :] - h[R:, :]                      # (R, F)

    # Mask-weighted reduction over residues, then project to one scalar per
    # batch element:  ddg_b = ( sum_l mask_bl * feat_diff_bl ) . wp
    masked = feat_diff * mask_ref[...].reshape(R, 1)     # broadcast over F
    summed = masked.reshape(TB, L, F).sum(axis=1)        # (TB, F)
    out_ref[...] = jnp.dot(summed, wp_ref[...],
                           preferred_element_type=jnp.float32)  # (TB, 1)


def ddg_readout(node_feat_wt, node_feat_mut, mask, params, *,
                rows_target=512, use_bf16=False):
    """Pallas implementation of DDGReadout.forward.

    node_feat_wt, node_feat_mut: (N, L, F) float32
    mask: (N, L) float32
    returns: (N,) float32
    """
    N, L, F = node_feat_wt.shape
    (w1a, w1b, b1, w2, b2, w3, b3, w4, b4, wp) = params

    # --- choose TB batch elements per grid step so each step feeds the MXU
    #     with >= rows_target rows (2*TB*L after stacking both concat orders).
    max_tb = max(1, rows_target // max(L, 1))
    if N <= max_tb:
        TB = N                                # single grid step
    else:
        TB = max(8, (max_tb // 8) * 8)        # multiple of 8 -> (TB,1) out tile
    Np = pl.cdiv(N, TB) * TB
    nb = Np // TB

    pad = Np - N
    if pad:
        node_feat_wt = jnp.pad(node_feat_wt, ((0, pad), (0, 0), (0, 0)))
        node_feat_mut = jnp.pad(node_feat_mut, ((0, pad), (0, 0), (0, 0)))
        mask = jnp.pad(mask, ((0, pad), (0, 0)))   # padded rows: mask == 0

    mask3 = mask.reshape(Np, L, 1).astype(jnp.float32)

    if use_bf16:
        # v6e/v7x: bf16 MXU operands, f32 accumulation (biases/ReLU/proj in f32).
        cast = lambda w: w.astype(jnp.bfloat16)
        w1a, w1b, w2, w3, w4 = map(cast, (w1a, w1b, w2, w3, w4))

    full_ff = pl.BlockSpec((F, F), lambda n: (0, 0))
    full_b = pl.BlockSpec((1, F), lambda n: (0, 0))

    out = pl.pallas_call(
        _ddg_readout_kernel,
        out_shape=jax.ShapeDtypeStruct((Np, 1), jnp.float32),
        grid=(nb,),
        in_specs=[
            pl.BlockSpec((TB, L, F), lambda n: (n, 0, 0)),  # node_feat_wt
            pl.BlockSpec((TB, L, F), lambda n: (n, 0, 0)),  # node_feat_mut
            pl.BlockSpec((TB, L, 1), lambda n: (n, 0, 0)),  # mask
            full_ff,                                        # W1[:F]  (F, F)
            full_ff,                                        # W1[F:]  (F, F)
            full_b,                                         # b1 (1, F)
            full_ff, full_b,                                # W2, b2
            full_ff, full_b,                                # W3, b3
            full_ff, full_b,                                # W4, b4
            pl.BlockSpec((F, 1), lambda n: (0, 0)),         # project weight
        ],
        out_specs=pl.BlockSpec((TB, 1), lambda n: (n, 0)),
        compiler_params=pltpu.CompilerParams(
            dimension_semantics=("parallel",)),             # v7x: 2 TCs
    )(node_feat_wt, node_feat_mut, mask3,
      w1a, w1b, b1, w2, b2, w3, b3, w4, b4, wp)

    return out[:N, 0]


def init_params(key, feat_dim):
    """Deterministic synthetic parameters, same shapes as DDGReadout(feat_dim)."""
    F = feat_dim
    ks = jax.random.split(key, 10)
    scale = 0.1
    # Linear(2F -> F): weight stored as (in=2F, out=F), split into two (F, F) halves.
    w1 = scale * jax.random.normal(ks[0], (2 * F, F), jnp.float32)
    w1a, w1b = w1[:F], w1[F:]
    b1 = scale * jax.random.normal(ks[1], (1, F), jnp.float32)
    w2 = scale * jax.random.normal(ks[2], (F, F), jnp.float32)
    b2 = scale * jax.random.normal(ks[3], (1, F), jnp.float32)
    w3 = scale * jax.random.normal(ks[4], (F, F), jnp.float32)
    b3 = scale * jax.random.normal(ks[5], (1, F), jnp.float32)
    w4 = scale * jax.random.normal(ks[6], (F, F), jnp.float32)
    b4 = scale * jax.random.normal(ks[7], (1, F), jnp.float32)
    wp = scale * jax.random.normal(ks[8], (F, 1), jnp.float32)  # project: no bias
    return (w1a, w1b, b1, w2, b2, w3, b3, w4, b4, wp)


def ddg_readout_ref(node_feat_wt, node_feat_mut, mask, params):
    """Pure-JAX reference mirroring the PyTorch module exactly."""
    (w1a, w1b, b1, w2, b2, w3, b3, w4, b4, wp) = params
    w1 = jnp.concatenate([w1a, w1b], axis=0)  # (2F, F)

    def mlp(x):
        h = jax.nn.relu(x @ w1 + b1)
        h = jax.nn.relu(h @ w2 + b2)
        h = jax.nn.relu(h @ w3 + b3)
        return h @ w4 + b4

    feat_wm = jnp.concatenate([node_feat_wt, node_feat_mut], axis=-1)
    feat_mw = jnp.concatenate([node_feat_mut, node_feat_wt], axis=-1)
    feat_diff = mlp(feat_wm) - mlp(feat_mw)
    per_residue = (feat_diff @ wp)[..., 0] * mask
    return per_residue.sum(axis=1)


if __name__ == "__main__":
    key = jax.random.PRNGKey(0)
    k_wt, k_mut, k_mask, k_params = jax.random.split(key, 4)

    L, F = 8, 32
    params = init_params(k_params, F)

    # Case 1: tiny batch (single grid step, TB == N).
    N = 2
    node_feat_wt = jax.random.normal(k_wt, (N, L, F), jnp.float32)
    node_feat_mut = jax.random.normal(k_mut, (N, L, F), jnp.float32)
    mask = (jax.random.uniform(k_mask, (N, L)) > 0.3).astype(jnp.float32)

    ddg = jax.block_until_ready(ddg_readout(node_feat_wt, node_feat_mut, mask, params))
    ddg_expected = ddg_readout_ref(node_feat_wt, node_feat_mut, mask, params)
    assert ddg.shape == (N,)
    assert jnp.allclose(ddg, ddg_expected, atol=1e-4, rtol=1e-4), (ddg, ddg_expected)

    # Case 2: larger batch exercising multi-step grid + batch padding.
    N2 = 70
    wt2 = jax.random.normal(jax.random.fold_in(k_wt, 1), (N2, L, F), jnp.float32)
    mut2 = jax.random.normal(jax.random.fold_in(k_mut, 1), (N2, L, F), jnp.float32)
    mask2 = (jax.random.uniform(jax.random.fold_in(k_mask, 1), (N2, L)) > 0.3
             ).astype(jnp.float32)

    ddg2 = jax.block_until_ready(ddg_readout(wt2, mut2, mask2, params))
    ddg2_expected = ddg_readout_ref(wt2, mut2, mask2, params)
    assert ddg2.shape == (N2,)
    assert jnp.allclose(ddg2, ddg2_expected, atol=1e-4, rtol=1e-4), (ddg2, ddg2_expected)

    print("KERNEL_OK")
</pallas_src>

<mosaic_0001>
module attributes {stable_mosaic.version = 11 : i64} {
  func.func @_ddg_readout_kernel(%arg0: i32, %arg1: memref<2x8x32xf32, #tpu.memory_space<vmem>>, %arg2: memref<2x8x32xf32, #tpu.memory_space<vmem>>, %arg3: memref<2x8x1xf32, #tpu.memory_space<vmem>>, %arg4: memref<32x32xf32, #tpu.memory_space<vmem>>, %arg5: memref<32x32xf32, #tpu.memory_space<vmem>>, %arg6: memref<1x32xf32, #tpu.memory_space<vmem>>, %arg7: memref<32x32xf32, #tpu.memory_space<vmem>>, %arg8: memref<1x32xf32, #tpu.memory_space<vmem>>, %arg9: memref<32x32xf32, #tpu.memory_space<vmem>>, %arg10: memref<1x32xf32, #tpu.memory_space<vmem>>, %arg11: memref<32x32xf32, #tpu.memory_space<vmem>>, %arg12: memref<1x32xf32, #tpu.memory_space<vmem>>, %arg13: memref<32x1xf32, #tpu.memory_space<vmem>>, %arg14: memref<2x1xf32, #tpu.memory_space<vmem>>) attributes {dimension_semantics = [#tpu.dimension_semantics<parallel>], iteration_bounds = array<i64: 1>, scalar_prefetch = 0 : i64, scratch_operands = 0 : i64, tpu.core_type = #tpu.core_type<tc>, window_params = [{transform_indices = @transform_0, window_bounds = array<i64: 2, 8, 32>}, {transform_indices = @transform_1, window_bounds = array<i64: 2, 8, 32>}, {transform_indices = @transform_2, window_bounds = array<i64: 2, 8, 1>}, {pipeline_mode = #tpu.pipeline_mode<synchronous>, transform_indices = @transform_3, window_bounds = array<i64: 32, 32>}, {pipeline_mode = #tpu.pipeline_mode<synchronous>, transform_indices = @transform_4, window_bounds = array<i64: 32, 32>}, {pipeline_mode = #tpu.pipeline_mode<synchronous>, transform_indices = @transform_5, window_bounds = array<i64: 1, 32>}, {pipeline_mode = #tpu.pipeline_mode<synchronous>, transform_indices = @transform_6, window_bounds = array<i64: 32, 32>}, {pipeline_mode = #tpu.pipeline_mode<synchronous>, transform_indices = @transform_7, window_bounds = array<i64: 1, 32>}, {pipeline_mode = #tpu.pipeline_mode<synchronous>, transform_indices = @transform_8, window_bounds = array<i64: 32, 32>}, {pipeline_mode = #tpu.pipeline_mode<synchronous>, transform_indices = @transform_9, window_bounds = array<i64: 1, 32>}, {pipeline_mode = #tpu.pipeline_mode<synchronous>, transform_indices = @transform_10, window_bounds = array<i64: 32, 32>}, {pipeline_mode = #tpu.pipeline_mode<synchronous>, transform_indices = @transform_11, window_bounds = array<i64: 1, 32>}, {pipeline_mode = #tpu.pipeline_mode<synchronous>, transform_indices = @transform_12, window_bounds = array<i64: 32, 1>}, {transform_indices = @transform_13, window_bounds = array<i64: 2, 1>}]} {
    %c0 = arith.constant 0 : index
    %c0_0 = arith.constant 0 : index
    %c0_1 = arith.constant 0 : index
    %0 = vector.load %arg1[%c0, %c0_0, %c0_1] : memref<2x8x32xf32, #tpu.memory_space<vmem>>, vector<2x8x32xf32>
    %1 = vector.shape_cast %0 : vector<2x8x32xf32> to vector<16x32xf32>
    %c0_2 = arith.constant 0 : index
    %c0_3 = arith.constant 0 : index
    %c0_4 = arith.constant 0 : index
    %2 = vector.load %arg2[%c0_2, %c0_3, %c0_4] : memref<2x8x32xf32, #tpu.memory_space<vmem>>, vector<2x8x32xf32>
    %3 = vector.shape_cast %2 : vector<2x8x32xf32> to vector<16x32xf32>
    %4 = tpu.concatenate %1, %3 in 0 : vector<16x32xf32>, vector<16x32xf32> -> vector<32x32xf32>
    %5 = tpu.concatenate %3, %1 in 0 : vector<16x32xf32>, vector<16x32xf32> -> vector<32x32xf32>
    %c0_5 = arith.constant 0 : index
    %c0_6 = arith.constant 0 : index
    %6 = vector.load %arg4[%c0_5, %c0_6] : memref<32x32xf32, #tpu.memory_space<vmem>>, vector<32x32xf32>
    %cst = arith.constant dense<0.000000e+00> : vector<32x32xf32>
    %7 = tpu.matmul %4, %6, %cst {dimension_numbers = #tpu.dot_dimension_numbers<[1], [0], [0], [1], [0, 0, 1, 1], [], []>} : vector<32x32xf32>, vector<32x32xf32>, vector<32x32xf32> -> vector<32x32xf32>
    %c0_7 = arith.constant 0 : index
    %c0_8 = arith.constant 0 : index
    %8 = vector.load %arg5[%c0_7, %c0_8] : memref<32x32xf32, #tpu.memory_space<vmem>>, vector<32x32xf32>
    %cst_9 = arith.constant dense<0.000000e+00> : vector<32x32xf32>
    %9 = tpu.matmul %5, %8, %cst_9 {dimension_numbers = #tpu.dot_dimension_numbers<[1], [0], [0], [1], [0, 0, 1, 1], [], []>} : vector<32x32xf32>, vector<32x32xf32>, vector<32x32xf32> -> vector<32x32xf32>
    %10 = arith.addf %7, %9 : vector<32x32xf32>
    %c0_10 = arith.constant 0 : index
    %c0_11 = arith.constant 0 : index
    %11 = vector.load %arg6[%c0_10, %c0_11] : memref<1x32xf32, #tpu.memory_space<vmem>>, vector<1x32xf32>
    %12 = vector.broadcast %11 : vector<1x32xf32> to vector<32x32xf32>
    %13 = arith.addf %10, %12 : vector<32x32xf32>
    %cst_12 = arith.constant 0.000000e+00 : f32
    %14 = vector.broadcast %cst_12 : f32 to vector<32x32xf32>
    %15 = arith.maximumf %13, %14 : vector<32x32xf32>
    %c0_13 = arith.constant 0 : index
    %c0_14 = arith.constant 0 : index
    %16 = vector.load %arg7[%c0_13, %c0_14] : memref<32x32xf32, #tpu.memory_space<vmem>>, vector<32x32xf32>
    %cst_15 = arith.constant dense<0.000000e+00> : vector<32x32xf32>
    %17 = tpu.matmul %15, %16, %cst_15 {dimension_numbers = #tpu.dot_dimension_numbers<[1], [0], [0], [1], [0, 0, 1, 1], [], []>} : vector<32x32xf32>, vector<32x32xf32>, vector<32x32xf32> -> vector<32x32xf32>
    %c0_16 = arith.constant 0 : index
    %c0_17 = arith.constant 0 : index
    %18 = vector.load %arg8[%c0_16, %c0_17] : memref<1x32xf32, #tpu.memory_space<vmem>>, vector<1x32xf32>
    %19 = vector.broadcast %18 : vector<1x32xf32> to vector<32x32xf32>
    %20 = arith.addf %17, %19 : vector<32x32xf32>
    %cst_18 = arith.constant 0.000000e+00 : f32
    %21 = vector.broadcast %cst_18 : f32 to vector<32x32xf32>
    %22 = arith.maximumf %20, %21 : vector<32x32xf32>
    %c0_19 = arith.constant 0 : index
    %c0_20 = arith.constant 0 : index
    %23 = vector.load %arg9[%c0_19, %c0_20] : memref<32x32xf32, #tpu.memory_space<vmem>>, vector<32x32xf32>
    %cst_21 = arith.constant dense<0.000000e+00> : vector<32x32xf32>
    %24 = tpu.matmul %22, %23, %cst_21 {dimension_numbers = #tpu.dot_dimension_numbers<[1], [0], [0], [1], [0, 0, 1, 1], [], []>} : vector<32x32xf32>, vector<32x32xf32>, vector<32x32xf32> -> vector<32x32xf32>
    %c0_22 = arith.constant 0 : index
    %c0_23 = arith.constant 0 : index
    %25 = vector.load %arg10[%c0_22, %c0_23] : memref<1x32xf32, #tpu.memory_space<vmem>>, vector<1x32xf32>
    %26 = vector.broadcast %25 : vector<1x32xf32> to vector<32x32xf32>
    %27 = arith.addf %24, %26 : vector<32x32xf32>
    %cst_24 = arith.constant 0.000000e+00 : f32
    %28 = vector.broadcast %cst_24 : f32 to vector<32x32xf32>
    %29 = arith.maximumf %27, %28 : vector<32x32xf32>
    %c0_25 = arith.constant 0 : index
    %c0_26 = arith.constant 0 : index
    %30 = vector.load %arg11[%c0_25, %c0_26] : memref<32x32xf32, #tpu.memory_space<vmem>>, vector<32x32xf32>
    %cst_27 = arith.constant dense<0.000000e+00> : vector<32x32xf32>
    %31 = tpu.matmul %29, %30, %cst_27 {dimension_numbers = #tpu.dot_dimension_numbers<[1], [0], [0], [1], [0, 0, 1, 1], [], []>} : vector<32x32xf32>, vector<32x32xf32>, vector<32x32xf32> -> vector<32x32xf32>
    %c0_28 = arith.constant 0 : index
    %c0_29 = arith.constant 0 : index
    %32 = vector.load %arg12[%c0_28, %c0_29] : memref<1x32xf32, #tpu.memory_space<vmem>>, vector<1x32xf32>
    %33 = vector.broadcast %32 : vector<1x32xf32> to vector<32x32xf32>
    %34 = arith.addf %31, %33 : vector<32x32xf32>
    %35 = vector.extract_strided_slice %34 {offsets = [0, 0], sizes = [16, 32], strides = [1, 1]} : vector<32x32xf32> to vector<16x32xf32>
    %36 = vector.extract_strided_slice %34 {offsets = [16, 0], sizes = [16, 32], strides = [1, 1]} : vector<32x32xf32> to vector<16x32xf32>
    %37 = arith.subf %35, %36 : vector<16x32xf32>
    %c0_30 = arith.constant 0 : index
    %c0_31 = arith.constant 0 : index
    %c0_32 = arith.constant 0 : index
    %38 = vector.load %arg3[%c0_30, %c0_31, %c0_32] : memref<2x8x1xf32, #tpu.memory_space<vmem>>, vector<2x8x1xf32>
    %39 = vector.shape_cast %38 : vector<2x8x1xf32> to vector<16x1xf32>
    %40 = vector.broadcast %39 : vector<16x1xf32> to vector<16x32xf32>
    %41 = arith.mulf %37, %40 : vector<16x32xf32>
    %42 = vector.shape_cast %41 : vector<16x32xf32> to vector<2x8x32xf32>
    %cst_33 = arith.constant dense<0.000000e+00> : vector<2x32xf32>
    %43 = vector.multi_reduction <add>, %42, %cst_33 [1] : vector<2x8x32xf32> to vector<2x32xf32>
    %c0_34 = arith.constant 0 : index
    %c0_35 = arith.constant 0 : index
    %44 = vector.load %arg13[%c0_34, %c0_35] : memref<32x1xf32, #tpu.memory_space<vmem>>, vector<32x1xf32>
    %cst_36 = arith.constant dense<0.000000e+00> : vector<2x1xf32>
    %45 = tpu.matmul %43, %44, %cst_36 {dimension_numbers = #tpu.dot_dimension_numbers<[1], [0], [0], [1], [0, 0, 1, 1], [], []>} : vector<2x32xf32>, vector<32x1xf32>, vector<2x1xf32> -> vector<2x1xf32>
    %c0_37 = arith.constant 0 : index
    %c0_38 = arith.constant 0 : index
    %46 = vector.load %arg14[%c0_37, %c0_38] : memref<2x1xf32, #tpu.memory_space<vmem>>, vector<2x1xf32>
    tpu.vector_store %arg14[%c0_37, %c0_38], %45 {strides = array<i32>} : memref<2x1xf32, #tpu.memory_space<vmem>>, vector<2x1xf32>,
    return
  }
  func.func @transform_0(%arg0: i32) -> (i32, i32, i32) {
    %c0_i32 = arith.constant 0 : i32
    %c0_i32_0 = arith.constant 0 : i32
    %c0_i32_1 = arith.constant 0 : i32
    return %arg0, %c0_i32, %c0_i32_0 : i32, i32, i32
  }
  func.func @transform_1(%arg0: i32) -> (i32, i32, i32) {
    %c0_i32 = arith.constant 0 : i32
    %c0_i32_0 = arith.constant 0 : i32
    %c0_i32_1 = arith.constant 0 : i32
    return %arg0, %c0_i32, %c0_i32_0 : i32, i32, i32
  }
  func.func @transform_2(%arg0: i32) -> (i32, i32, i32) {
    %c0_i32 = arith.constant 0 : i32
    %c0_i32_0 = arith.constant 0 : i32
    %c0_i32_1 = arith.constant 0 : i32
    return %arg0, %c0_i32, %c0_i32_0 : i32, i32, i32
  }
  func.func @transform_3(%arg0: i32) -> (i32, i32) {
    %c0_i32 = arith.constant 0 : i32
    %c0_i32_0 = arith.constant 0 : i32
    %c0_i32_1 = arith.constant 0 : i32
    return %c0_i32, %c0_i32_0 : i32, i32
  }
  func.func @transform_4(%arg0: i32) -> (i32, i32) {
    %c0_i32 = arith.constant 0 : i32
    %c0_i32_0 = arith.constant 0 : i32
    %c0_i32_1 = arith.constant 0 : i32
    return %c0_i32, %c0_i32_0 : i32, i32
  }
  func.func @transform_5(%arg0: i32) -> (i32, i32) {
    %c0_i32 = arith.constant 0 : i32
    %c0_i32_0 = arith.constant 0 : i32
    %c0_i32_1 = arith.constant 0 : i32
    return %c0_i32, %c0_i32_0 : i32, i32
  }
  func.func @transform_6(%arg0: i32) -> (i32, i32) {
    %c0_i32 = arith.constant 0 : i32
    %c0_i32_0 = arith.constant 0 : i32
    %c0_i32_1 = arith.constant 0 : i32
    return %c0_i32, %c0_i32_0 : i32, i32
  }
  func.func @transform_7(%arg0: i32) -> (i32, i32) {
    %c0_i32 = arith.constant 0 : i32
    %c0_i32_0 = arith.constant 0 : i32
    %c0_i32_1 = arith.constant 0 : i32
    return %c0_i32, %c0_i32_0 : i32, i32
  }
  func.func @transform_8(%arg0: i32) -> (i32, i32) {
    %c0_i32 = arith.constant 0 : i32
    %c0_i32_0 = arith.constant 0 : i32
    %c0_i32_1 = arith.constant 0 : i32
    return %c0_i32, %c0_i32_0 : i32, i32
  }
  func.func @transform_9(%arg0: i32) -> (i32, i32) {
    %c0_i32 = arith.constant 0 : i32
    %c0_i32_0 = arith.constant 0 : i32
    %c0_i32_1 = arith.constant 0 : i32
    return %c0_i32, %c0_i32_0 : i32, i32
  }
  func.func @transform_10(%arg0: i32) -> (i32, i32) {
    %c0_i32 = arith.constant 0 : i32
    %c0_i32_0 = arith.constant 0 : i32
    %c0_i32_1 = arith.constant 0 : i32
    return %c0_i32, %c0_i32_0 : i32, i32
  }
  func.func @transform_11(%arg0: i32) -> (i32, i32) {
    %c0_i32 = arith.constant 0 : i32
    %c0_i32_0 = arith.constant 0 : i32
    %c0_i32_1 = arith.constant 0 : i32
    return %c0_i32, %c0_i32_0 : i32, i32
  }
  func.func @transform_12(%arg0: i32) -> (i32, i32) {
    %c0_i32 = arith.constant 0 : i32
    %c0_i32_0 = arith.constant 0 : i32
    %c0_i32_1 = arith.constant 0 : i32
    return %c0_i32, %c0_i32_0 : i32, i32
  }
  func.func @transform_13(%arg0: i32) -> (i32, i32) {
    %c0_i32 = arith.constant 0 : i32
    %c0_i32_0 = arith.constant 0 : i32
    return %arg0, %c0_i32 : i32, i32
  }
}

</mosaic_0001>

<llo_original>
// kernel: tpu_custom_call.1
$region0: #{tpu_custom_call.1}
  #allocation0 [shape = 'u32[]', space=smem, size = 0x4, offset = 0x4, fixed_abs, tag = 'smem constant byte address 0x4 - core index']
  #allocation1 [shape = 'u32[72,128]{1,0:T(1,128)}', space=vmem, size = 0x9000, scoped, tag = 'internal scratch']
  %s0 = inlined_call_operand.vmem [shape: f32[2,8,32], index: 0, kind: input, shape index: {}]
  %s1 = inlined_call_operand.hbm [shape: f32[2,8,32], index: 1, kind: input, shape index: {}]
  %s2 = inlined_call_operand.vmem [shape: f32[2,8,1], index: 2, kind: input, shape index: {}]
  %s3 = inlined_call_operand.vmem [shape: f32[32,32], index: 3, kind: input, shape index: {}]
  %s4 = inlined_call_operand.hbm [shape: f32[32,32], index: 4, kind: input, shape index: {}]
  %s5 = inlined_call_operand.vmem [shape: f32[1,32], index: 5, kind: input, shape index: {}]
  %s6 = inlined_call_operand.hbm [shape: f32[32,32], index: 6, kind: input, shape index: {}]
  %s7 = inlined_call_operand.vmem [shape: f32[1,32], index: 7, kind: input, shape index: {}]
  %s8 = inlined_call_operand.hbm [shape: f32[32,32], index: 8, kind: input, shape index: {}]
  %s9 = inlined_call_operand.vmem [shape: f32[1,32], index: 9, kind: input, shape index: {}]
  %s10 = inlined_call_operand.hbm [shape: f32[32,32], index: 10, kind: input, shape index: {}]
  %s11 = inlined_call_operand.vmem [shape: f32[1,32], index: 11, kind: input, shape index: {}]
  %s12 = inlined_call_operand.vmem [shape: f32[32,1], index: 12, kind: input, shape index: {}]
  %s13 = inlined_call_operand.vmem [shape: f32[2,1], index: 13, kind: output, shape index: {}]
  %s14 = sld [smem:[#allocation0]]
  $region82: #{tpu_custom_call.1} parent=0
    _
  %s16 = ssub.s32 1, %s14
  %s17 = scalar_select 0, %s16, %s14
  $region1: #{tpu_custom_call.1} parent=0
    #allocation2 [shape = 'u8[8192]{0}', space=vmem, size = 0x2000, scoped, tag = 'input window, operand 1, single buffered']
    #allocation3 [shape = 's32[1]{0}', space=sflag, size = 0x4, scoped, tag = 'scoped memory for tpu_custom_call.1']
    #allocation4 [shape = 'u8[16384]{0}', space=vmem, size = 0x4000, scoped, tag = 'input window, operand 4, single buffered']
    #allocation5 [shape = 's32[1]{0}', space=sflag, size = 0x4, scoped, tag = 'scoped memory for tpu_custom_call.1']
    #allocation6 [shape = 'u8[16384]{0}', space=vmem, size = 0x4000, scoped, tag = 'input window, operand 6, single buffered']
    #allocation7 [shape = 'u8[16384]{0}', space=vmem, size = 0x4000, scoped, tag = 'input window, operand 8, single buffered']
    #allocation8 [shape = 's32[1]{0}', space=sflag, size = 0x4, scoped, tag = 'scoped memory for tpu_custom_call.1']
    #allocation9 [shape = 'u8[16384]{0}', space=vmem, size = 0x4000, scoped, tag = 'input window, operand 10, single buffered']
    %18 = vsyncpa [#allocation3], 0
    %19 = vsyncpa [#allocation5], 0
    %20 = vsyncpa [#allocation8], 0
    // Predicated region
    $region2: #{tpu_custom_call.1} parent=1 // pred_check
      _
    $region3: #{tpu_custom_call.1} parent=1 // pred_check_branch
      %22 = sbr.rel (0) target = $region5
    $region4: #{tpu_custom_call.1} parent=1 // pred_region
      _
    $region5: #{tpu_custom_call.1} parent=1 // pred_fallthru
      _
    // Predicated region
    $region6: #{tpu_custom_call.1} parent=1 // pred_check
      _
    $region7: #{tpu_custom_call.1} parent=1 // pred_check_branch
      %24 = sbr.rel (0) target = $region9
    $region8: #{tpu_custom_call.1} parent=1 // pred_region
      %26 = vsyncadd [#allocation3], 0
      %s27 = sshll.u32 %s1, 4
      %s28 = int_to_ptr.hbm [resolvable:$true] %s27
      %s29 = sshll.u32 [#allocation2], 4
      %s30 = int_to_ptr.vmem [resolvable:$true] %s29
      %35 = dma.hbm_to_vmem [thread:$0]  %s28, 256, %s30, [#allocation3], 128, 128, 8
    $region9: #{tpu_custom_call.1} parent=1 // pred_fallthru
      _
    // Predicated region
    $region10: #{tpu_custom_call.1} parent=1 // pred_check
      _
    $region11: #{tpu_custom_call.1} parent=1 // pred_check_branch
      %37 = sbr.rel (0) target = $region13
    $region12: #{tpu_custom_call.1} parent=1 // pred_region
      _
    $region13: #{tpu_custom_call.1} parent=1 // pred_fallthru
      _
    // Predicated region
    $region14: #{tpu_custom_call.1} parent=1 // pred_check
      _
    $region15: #{tpu_custom_call.1} parent=1 // pred_check_branch
      %39 = sbr.rel (0) target = $region17
    $region16: #{tpu_custom_call.1} parent=1 // pred_region
      _
    $region17: #{tpu_custom_call.1} parent=1 // pred_fallthru
      _
    // Predicated region
    $region18: #{tpu_custom_call.1} parent=1 // pred_check
      _
    $region19: #{tpu_custom_call.1} parent=1 // pred_check_branch
      %41 = sbr.rel (0) target = $region21
    $region20: #{tpu_custom_call.1} parent=1 // pred_region
      %43 = vsyncadd [#allocation5], 0
      %s44 = sshll.u32 %s4, 4
      %s45 = int_to_ptr.hbm [resolvable:$true] %s44
      %s46 = sshll.u32 [#allocation4], 4
      %s47 = int_to_ptr.vmem [resolvable:$true] %s46
      %52 = dma.hbm_to_vmem [thread:$0]  %s45, 512, %s47, [#allocation5], 128, 128, 8
    $region21: #{tpu_custom_call.1} parent=1 // pred_fallthru
      _
    // Predicated region
    $region22: #{tpu_custom_call.1} parent=1 // pred_check
      _
    $region23: #{tpu_custom_call.1} parent=1 // pred_check_branch
      %54 = sbr.rel (0) target = $region25
    $region24: #{tpu_custom_call.1} parent=1 // pred_region
      _
    $region25: #{tpu_custom_call.1} parent=1 // pred_fallthru
      _
    // Predicated region
    $region26: #{tpu_custom_call.1} parent=1 // pred_check
      _
    $region27: #{tpu_custom_call.1} parent=1 // pred_check_branch
      %56 = sbr.rel (0) target = $region29
    $region28: #{tpu_custom_call.1} parent=1 // pred_region
      %58 = vsyncadd [#allocation5], 0
      %s59 = sshll.u32 %s6, 4
      %s60 = int_to_ptr.hbm [resolvable:$true] %s59
      %s61 = sshll.u32 [#allocation6], 4
      %s62 = int_to_ptr.vmem [resolvable:$true] %s61
      %67 = dma.hbm_to_vmem [thread:$0]  %s60, 512, %s62, [#allocation5], 128, 128, 8
    $region29: #{tpu_custom_call.1} parent=1 // pred_fallthru
      _
    // Predicated region
    $region30: #{tpu_custom_call.1} parent=1 // pred_check
      _
    $region31: #{tpu_custom_call.1} parent=1 // pred_check_branch
      %69 = sbr.rel (0) target = $region33
    $region32: #{tpu_custom_call.1} parent=1 // pred_region
      _
    $region33: #{tpu_custom_call.1} parent=1 // pred_fallthru
      _
    // Predicated region
    $region34: #{tpu_custom_call.1} parent=1 // pred_check
      _
    $region35: #{tpu_custom_call.1} parent=1 // pred_check_branch
      %71 = sbr.rel (0) target = $region37
    $region36: #{tpu_custom_call.1} parent=1 // pred_region
      %73 = vsyncadd [#allocation8], 0
      %s74 = sshll.u32 %s8, 4
      %s75 = int_to_ptr.hbm [resolvable:$true] %s74
      %s76 = sshll.u32 [#allocation7], 4
      %s77 = int_to_ptr.vmem [resolvable:$true] %s76
      %82 = dma.hbm_to_vmem [thread:$0]  %s75, 512, %s77, [#allocation8], 128, 128, 8
    $region37: #{tpu_custom_call.1} parent=1 // pred_fallthru
      _
    // Predicated region
    $region38: #{tpu_custom_call.1} parent=1 // pred_check
      _
    $region39: #{tpu_custom_call.1} parent=1 // pred_check_branch
      %84 = sbr.rel (0) target = $region41
    $region40: #{tpu_custom_call.1} parent=1 // pred_region
      _
    $region41: #{tpu_custom_call.1} parent=1 // pred_fallthru
      _
    // Predicated region
    $region42: #{tpu_custom_call.1} parent=1 // pred_check
      _
    $region43: #{tpu_custom_call.1} parent=1 // pred_check_branch
      %86 = sbr.rel (0) target = $region45
    $region44: #{tpu_custom_call.1} parent=1 // pred_region
      %88 = vsyncadd [#allocation8], 0
      %s89 = sshll.u32 %s10, 4
      %s90 = int_to_ptr.hbm [resolvable:$true] %s89
      %s91 = sshll.u32 [#allocation9], 4
      %s92 = int_to_ptr.vmem [resolvable:$true] %s91
      %97 = dma.hbm_to_vmem [thread:$0]  %s90, 512, %s92, [#allocation8], 128, 128, 8
    $region45: #{tpu_custom_call.1} parent=1 // pred_fallthru
      _
    // Predicated region
    $region46: #{tpu_custom_call.1} parent=1 // pred_check
      _
    $region47: #{tpu_custom_call.1} parent=1 // pred_check_branch
      %99 = sbr.rel (0) target = $region49
    $region48: #{tpu_custom_call.1} parent=1 // pred_region
      _
    $region49: #{tpu_custom_call.1} parent=1 // pred_fallthru
      _
    // Predicated region
    $region50: #{tpu_custom_call.1} parent=1 // pred_check
      _
    $region51: #{tpu_custom_call.1} parent=1 // pred_check_branch
      %101 = sbr.rel (0) target = $region53
    $region52: #{tpu_custom_call.1} parent=1 // pred_region
      _
    $region53: #{tpu_custom_call.1} parent=1 // pred_fallthru
      _
    // Predicated region
    $region54: #{tpu_custom_call.1} parent=1 // pred_check
      _
    $region55: #{tpu_custom_call.1} parent=1 // pred_check_branch
      %103 = sbr.rel (0) target = $region57
    $region56: #{tpu_custom_call.1} parent=1 // pred_region
      %105 = dma.done [#allocation3], 256
    $region57: #{tpu_custom_call.1} parent=1 // pred_fallthru
      _
    // Predicated region
    $region58: #{tpu_custom_call.1} parent=1 // pred_check
      _
    $region59: #{tpu_custom_call.1} parent=1 // pred_check_branch
      %107 = sbr.rel (0) target = $region61
    $region60: #{tpu_custom_call.1} parent=1 // pred_region
      %109 = dma.done [#allocation5], 512
    $region61: #{tpu_custom_call.1} parent=1 // pred_fallthru
      _
    // Predicated region
    $region62: #{tpu_custom_call.1} parent=1 // pred_check
      _
    $region63: #{tpu_custom_call.1} parent=1 // pred_check_branch
      %111 = sbr.rel (0) target = $region65
    $region64: #{tpu_custom_call.1} parent=1 // pred_region
      %113 = dma.done [#allocation5], 512
    $region65: #{tpu_custom_call.1} parent=1 // pred_fallthru
      _
    // Predicated region
    $region66: #{tpu_custom_call.1} parent=1 // pred_check
      _
    $region67: #{tpu_custom_call.1} parent=1 // pred_check_branch
      %115 = sbr.rel (0) target = $region69
    $region68: #{tpu_custom_call.1} parent=1 // pred_region
      %117 = dma.done [#allocation8], 512
    $region69: #{tpu_custom_call.1} parent=1 // pred_fallthru
      _
    // Predicated region
    $region70: #{tpu_custom_call.1} parent=1 // pred_check
      _
    $region71: #{tpu_custom_call.1} parent=1 // pred_check_branch
      %119 = sbr.rel (0) target = $region73
    $region72: #{tpu_custom_call.1} parent=1 // pred_region
      %121 = dma.done [#allocation8], 512
    $region73: #{tpu_custom_call.1} parent=1 // pred_fallthru
      _
    %v122 = vld [vmem:[%s0] sm:$0xff]
    %v123 = vld [vmem:[%s0 + $0x8] sm:$0xff]
    %v124 = vld [vmem:[#allocation2] sm:$0xff]
    %v125 = vld [vmem:[#allocation2 + $0x8] sm:$0xff]
    %v126 = vld [vmem:[%s3] sm:$0xff]
    %v127 = vld [vmem:[%s3 + $0x8] sm:$0xff]
    %v128 = vld [vmem:[%s3 + $0x10] sm:$0xff]
    %v129 = vld [vmem:[%s3 + $0x18] sm:$0xff]
    %v130 = vld [vmem:[#allocation4] sm:$0xff]
    %v131 = vld [vmem:[#allocation4 + $0x8] sm:$0xff]
    %v132 = vld [vmem:[#allocation4 + $0x10] sm:$0xff]
    %v133 = vld [vmem:[#allocation4 + $0x18] sm:$0xff]
    %vm134 = vcmask 261120
    %v136 = vsel %vm134, %v124, 0
    %v139 = vsel %vm134, %v125, 0
    %v142 = vsel %vm134, %v122, 0
    %v145 = vsel %vm134, %v123, 0
    %147 = vmatpush.msra.mxu0 0.0
    %148 = vmatpush.msra.mxu0 0.0
    %149 = vmatpush.msra.mxu0 0.0
    %150 = vmatpush.msra.mxu0 0.0
    %151 = vmatpush.msra.mxu0 0.0
    %152 = vmatpush.msra.mxu0 0.0
    %153 = vmatpush.msra.mxu0 0.0
    %154 = vmatpush.msra.mxu0 0.0
    %155 = vmatpush.msra.mxu0 0.0
    %156 = vmatpush.msra.mxu0 0.0
    %157 = vmatpush.msra.mxu0 0.0
    %158 = vmatpush.msra.mxu0 0.0
    %159 = vmatpush.msra.mxu0 %v133
    %160 = vmatpush.msra.mxu0 %v132
    %161 = vmatpush.msra.mxu0 %v131
    %162 = vmatpush.msra.mxu0 %v130
    %163 = vmatmul.f32.gmra.mxu0 %v136
    %v164 = vpop.f32.mrf.mxu0
    %v165 = vadd.f32 0.0, %v164
    %166 = vmatmul.f32.gmra.mxu0 %v139
    %v167 = vpop.f32.mrf.mxu0
    %v168 = vadd.f32 0.0, %v167
    %169 = vmatmul.f32.gmra.mxu0 %v142
    %v170 = vpop.f32.mrf.mxu0
    %v171 = vadd.f32 0.0, %v170
    %172 = vmatmul.f32.gmra.mxu0 %v145
    %v173 = vpop.f32.mrf.mxu0
    %v174 = vadd.f32 0.0, %v173
    %175 = vdwg.mxu0
    %176 = vmatpush.msra.mxu0 0.0
    %177 = vmatpush.msra.mxu0 0.0
    %178 = vmatpush.msra.mxu0 0.0
    %179 = vmatpush.msra.mxu0 0.0
    %180 = vmatpush.msra.mxu0 0.0
    %181 = vmatpush.msra.mxu0 0.0
    %182 = vmatpush.msra.mxu0 0.0
    %183 = vmatpush.msra.mxu0 0.0
    %184 = vmatpush.msra.mxu0 0.0
    %185 = vmatpush.msra.mxu0 0.0
    %186 = vmatpush.msra.mxu0 0.0
    %187 = vmatpush.msra.mxu0 0.0
    %188 = vmatpush.msra.mxu0 %v129
    %189 = vmatpush.msra.mxu0 %v128
    %190 = vmatpush.msra.mxu0 %v127
    %191 = vmatpush.msra.mxu0 %v126
    %192 = vmatmul.f32.gmra.mxu0 %v142
    %v193 = vpop.f32.mrf.mxu0
    %v194 = vadd.f32 %v165, %v193
    %195 = vmatmul.f32.gmra.mxu0 %v145
    %v196 = vpop.f32.mrf.mxu0
    %v197 = vadd.f32 %v168, %v196
    %198 = vmatmul.f32.gmra.mxu0 %v136
    %v199 = vpop.f32.mrf.mxu0
    %v200 = vadd.f32 %v171, %v199
    %201 = vmatmul.f32.gmra.mxu0 %v139
    %v202 = vpop.f32.mrf.mxu0
    %v203 = vadd.f32 %v174, %v202
    %204 = vdwg.mxu0
    %v205 = vld [vmem:[%s5] sm:$0x1]
    %v207 = vperm.slane %v205, 0
    %v209 = vadd.f32 %v194, %v207
    %v210 = vadd.f32 %v197, %v207
    %v211 = vadd.f32 %v200, %v207
    %v212 = vadd.f32 %v203, %v207
    %v213 = vmax.f32 %v209, 0.0
    %v214 = vmax.f32 %v210, 0.0
    %v215 = vmax.f32 %v211, 0.0
    %v216 = vmax.f32 %v212, 0.0
    %v217 = vld [vmem:[#allocation6] sm:$0xff]
    %v218 = vld [vmem:[#allocation6 + $0x8] sm:$0xff]
    %v219 = vld [vmem:[#allocation6 + $0x10] sm:$0xff]
    %v220 = vld [vmem:[#allocation6 + $0x18] sm:$0xff]
    %v221 = vld [vmem:[%s7] sm:$0x1]
    %v223 = vperm.slane %v221, 0
    %v226 = vsel %vm134, %v213, 0
    %v229 = vsel %vm134, %v214, 0
    %v232 = vsel %vm134, %v215, 0
    %v235 = vsel %vm134, %v216, 0
    %237 = vmatpush.msra.mxu0 0.0
    %238 = vmatpush.msra.mxu0 0.0
    %239 = vmatpush.msra.mxu0 0.0
    %240 = vmatpush.msra.mxu0 0.0
    %241 = vmatpush.msra.mxu0 0.0
    %242 = vmatpush.msra.mxu0 0.0
    %243 = vmatpush.msra.mxu0 0.0
    %244 = vmatpush.msra.mxu0 0.0
    %245 = vmatpush.msra.mxu0 0.0
    %246 = vmatpush.msra.mxu0 0.0
    %247 = vmatpush.msra.mxu0 0.0
    %248 = vmatpush.msra.mxu0 0.0
    %249 = vmatpush.msra.mxu0 %v220
    %250 = vmatpush.msra.mxu0 %v219
    %251 = vmatpush.msra.mxu0 %v218
    %252 = vmatpush.msra.mxu0 %v217
    %253 = vmatmul.f32.gmra.mxu0 %v226
    %v254 = vpop.f32.mrf.mxu0
    %v255 = vadd.f32 %v223, %v254
    %256 = vmatmul.f32.gmra.mxu0 %v229
    %v257 = vpop.f32.mrf.mxu0
    %v258 = vadd.f32 %v223, %v257
    %259 = vmatmul.f32.gmra.mxu0 %v232
    %v260 = vpop.f32.mrf.mxu0
    %v261 = vadd.f32 %v223, %v260
    %262 = vmatmul.f32.gmra.mxu0 %v235
    %v263 = vpop.f32.mrf.mxu0
    %v264 = vadd.f32 %v223, %v263
    %265 = vdwg.mxu0
    %v266 = vmax.f32 %v255, 0.0
    %v267 = vmax.f32 %v258, 0.0
    %v268 = vmax.f32 %v261, 0.0
    %v269 = vmax.f32 %v264, 0.0
    %v270 = vld [vmem:[#allocation7] sm:$0xff]
    %v271 = vld [vmem:[#allocation7 + $0x8] sm:$0xff]
    %v272 = vld [vmem:[#allocation7 + $0x10] sm:$0xff]
    %v273 = vld [vmem:[#allocation7 + $0x18] sm:$0xff]
    %v274 = vld [vmem:[%s9] sm:$0x1]
    %v276 = vperm.slane %v274, 0
    %v279 = vsel %vm134, %v266, 0
    %v282 = vsel %vm134, %v267, 0
    %v285 = vsel %vm134, %v268, 0
    %v288 = vsel %vm134, %v269, 0
    %290 = vmatpush.msra.mxu0 0.0
    %291 = vmatpush.msra.mxu0 0.0
    %292 = vmatpush.msra.mxu0 0.0
    %293 = vmatpush.msra.mxu0 0.0
    %294 = vmatpush.msra.mxu0 0.0
    %295 = vmatpush.msra.mxu0 0.0
    %296 = vmatpush.msra.mxu0 0.0
    %297 = vmatpush.msra.mxu0 0.0
    %298 = vmatpush.msra.mxu0 0.0
    %299 = vmatpush.msra.mxu0 0.0
    %300 = vmatpush.msra.mxu0 0.0
    %301 = vmatpush.msra.mxu0 0.0
    %302 = vmatpush.msra.mxu0 %v273
    %303 = vmatpush.msra.mxu0 %v272
    %304 = vmatpush.msra.mxu0 %v271
    %305 = vmatpush.msra.mxu0 %v270
    %306 = vmatmul.f32.gmra.mxu0 %v279
    %v307 = vpop.f32.mrf.mxu0
    %v308 = vadd.f32 %v276, %v307
    %309 = vmatmul.f32.gmra.mxu0 %v282
    %v310 = vpop.f32.mrf.mxu0
    %v311 = vadd.f32 %v276, %v310
    %312 = vmatmul.f32.gmra.mxu0 %v285
    %v313 = vpop.f32.mrf.mxu0
    %v314 = vadd.f32 %v276, %v313
    %315 = vmatmul.f32.gmra.mxu0 %v288
    %v316 = vpop.f32.mrf.mxu0
    %v317 = vadd.f32 %v276, %v316
    %318 = vdwg.mxu0
    %v319 = vmax.f32 %v308, 0.0
    %v320 = vmax.f32 %v311, 0.0
    %v321 = vmax.f32 %v314, 0.0
    %v322 = vmax.f32 %v317, 0.0
    %v323 = vld [vmem:[#allocation9] sm:$0xff]
    %v324 = vld [vmem:[#allocation9 + $0x8] sm:$0xff]
    %v325 = vld [vmem:[#allocation9 + $0x10] sm:$0xff]
    %v326 = vld [vmem:[#allocation9 + $0x18] sm:$0xff]
    %v327 = vld [vmem:[%s11] sm:$0x1]
    %v329 = vperm.slane %v327, 0
    %v332 = vsel %vm134, %v319, 0
    %v335 = vsel %vm134, %v320, 0
    %v338 = vsel %vm134, %v321, 0
    %v341 = vsel %vm134, %v322, 0
    %343 = vmatpush.msra.mxu0 0.0
    %344 = vmatpush.msra.mxu0 0.0
    %345 = vmatpush.msra.mxu0 0.0
    %346 = vmatpush.msra.mxu0 0.0
    %347 = vmatpush.msra.mxu0 0.0
    %348 = vmatpush.msra.mxu0 0.0
    %349 = vmatpush.msra.mxu0 0.0
    %350 = vmatpush.msra.mxu0 0.0
    %351 = vmatpush.msra.mxu0 0.0
    %352 = vmatpush.msra.mxu0 0.0
    %353 = vmatpush.msra.mxu0 0.0
    %354 = vmatpush.msra.mxu0 0.0
    %355 = vmatpush.msra.mxu0 %v326
    %356 = vmatpush.msra.mxu0 %v325
    %357 = vmatpush.msra.mxu0 %v324
    %358 = vmatpush.msra.mxu0 %v323
    %359 = vmatmul.f32.gmra.mxu0 %v332
    %v360 = vpop.f32.mrf.mxu0
    %v361 = vadd.f32 %v329, %v360
    %362 = vmatmul.f32.gmra.mxu0 %v335
    %v363 = vpop.f32.mrf.mxu0
    %v364 = vadd.f32 %v329, %v363
    %365 = vmatmul.f32.gmra.mxu0 %v338
    %v366 = vpop.f32.mrf.mxu0
    %v367 = vadd.f32 %v329, %v366
    %368 = vmatmul.f32.gmra.mxu0 %v341
    %v369 = vpop.f32.mrf.mxu0
    %v370 = vadd.f32 %v329, %v369
    %371 = vdwg.mxu0
    %v372 = vsub.f32 %v361, %v367
    %v373 = vsub.f32 %v364, %v370
    %v374 = vld [vmem:[%s2] sm:$0xff]
    %v375 = vld [vmem:[%s2 + $0x8] sm:$0xff]
    %377 = vset.pattern.permute.xlu0 0
    %378 = vperm.xlu0 %377, %v374
    %v379 = vpop.permute.xlu0 %378
    %382 = vset.pattern.permute.xlu0 0
    %383 = vperm.xlu0 %382, %v375
    %v384 = vpop.permute.xlu0 %383
    %v386 = vmul.f32 %v372, %v379
    %v387 = vmul.f32 %v373, %v384
    %v388 = vsel %vm134, %v386, 0.0
    %v389 = vrot.slane %v388, 4
    %v390 = vadd.f32 %v388, %v389
    %v391 = vrot.slane %v390, 2
    %v392 = vadd.f32 %v390, %v391
    %v393 = vrot.slane %v392, 1
    %v394 = vadd.f32 %v392, %v393
    %v395 = vsel %vm134, %v387, 0.0
    %v396 = vrot.slane %v395, 4
    %v397 = vadd.f32 %v395, %v396
    %v398 = vrot.slane %v397, 2
    %v399 = vadd.f32 %v397, %v398
    %v400 = vrot.slane %v399, 1
    %v401 = vadd.f32 %v399, %v400
    %v402 = vld [vmem:[%s12] sm:$0xff]
    %v403 = vld [vmem:[%s12 + $0x8] sm:$0xff]
    %v404 = vld [vmem:[%s12 + $0x10] sm:$0xff]
    %v405 = vld [vmem:[%s12 + $0x18] sm:$0xff]
    %vm408 = vcmask 1041409
    %v409 = vsel %vm408, %v401, %v394
    %v410 = vsel %vm134, %v409, 0
    %412 = vmatpush.msra.mxu0 0.0
    %413 = vmatpush.msra.mxu0 0.0
    %414 = vmatpush.msra.mxu0 0.0
    %415 = vmatpush.msra.mxu0 0.0
    %416 = vmatpush.msra.mxu0 0.0
    %417 = vmatpush.msra.mxu0 0.0
    %418 = vmatpush.msra.mxu0 0.0
    %419 = vmatpush.msra.mxu0 0.0
    %420 = vmatpush.msra.mxu0 0.0
    %421 = vmatpush.msra.mxu0 0.0
    %422 = vmatpush.msra.mxu0 0.0
    %423 = vmatpush.msra.mxu0 0.0
    %424 = vmatpush.msra.mxu0 %v405
    %425 = vmatpush.msra.mxu0 %v404
    %426 = vmatpush.msra.mxu0 %v403
    %427 = vmatpush.msra.mxu0 %v402
    %428 = vmatmul.f32.gmra.mxu0 %v410
    %v429 = vpop.f32.mrf.mxu0
    %v430 = vadd.f32 0.0, %v429
    %431 = vdwg.mxu0
    %vm432 = vcmask 1024
    %433 = vst.msk [vmem:[%s13] sm:$0x3] %vm432, %v430
    // Predicated region
    $region74: #{tpu_custom_call.1} parent=1 // pred_check
      _
    $region75: #{tpu_custom_call.1} parent=1 // pred_check_branch
      %435 = sbr.rel (0) target = $region77
    $region76: #{tpu_custom_call.1} parent=1 // pred_region
      _
    $region77: #{tpu_custom_call.1} parent=1 // pred_fallthru
      _
    // Predicated region
    $region78: #{tpu_custom_call.1} parent=1 // pred_check
      _
    $region79: #{tpu_custom_call.1} parent=1 // pred_check_branch
      %437 = sbr.rel (0) target = $region81
    $region80: #{tpu_custom_call.1} parent=1 // pred_region
      _
    $region81: #{tpu_custom_call.1} parent=1 // pred_fallthru
      _
    %438 = vsyncpa [#allocation3], 1
    %439 = vsyncpa [#allocation5], 1
    %440 = vsyncpa [#allocation8], 1

</llo_original>
